<compile_context>
chip_gen: v6e
topology: v6e:2x2x1
jax: 0.10.0
libtpu: 0.0.40
codegen_flags: <defaults>
</compile_context>

<pallas_src>
import jax
import jax.numpy as jnp
from jax.experimental import pallas as pl
from jax.experimental.pallas import tpu as pltpu

_LANE = 128


def _swish_kernel(x_ref, o_ref):
    xf = x_ref[...].astype(jnp.float32)      # f32 math; sigmoid's exp/rcp hit the EUP
    o_ref[...] = (xf * jax.nn.sigmoid(xf)).astype(o_ref.dtype)


def _round_up(n, m):
    return ((n + m - 1) // m) * m


def swish(x, *, max_block_bytes=4 * 1024 * 1024):
    """Elementwise swish matching torch's x.mul(torch.sigmoid(x))."""
    orig_shape = x.shape
    orig_dtype = x.dtype
    total = int(x.size)
    if total == 0:
        return x

    itemsize = jnp.dtype(orig_dtype).itemsize
    # Native sublane packing: f32 -> 8 rows per vreg, bf16/f16 -> 16, int8/fp8 -> 32.
    sub = 8 * max(1, 4 // itemsize)

    # Lane-align the flat length. Typical conv activations have total % 128 == 0,
    # so no padding happens and all reshapes below are free (contiguous views).
    padded_total = _round_up(total, _LANE)
    rows = padded_total // _LANE

    xflat = jnp.ravel(x)
    if padded_total != total:
        # TODO(synk): tail (<128 elems) could be handled in-kernel to skip this pad pass.
        xflat = jnp.pad(xflat, (0, padded_total - total))   # swish(0) == 0, sliced off below
    x2d = xflat.reshape(rows, _LANE)

    if rows < 2 * sub:
        # Tiny slab: one block covering the whole array (full-dim block shape is
        # exempt from the multiple-of-(8,128) rule). Single grid step = least overhead.
        block_rows = rows
    else:
        # Row budget per block so block_bytes <= max_block_bytes (multiple of `sub`).
        cap_rows = max(sub, (max_block_bytes // (_LANE * itemsize)) // sub * sub)
        # Prefer >= 2 grid steps so the 'parallel' axis can shard across both
        # TensorCores on v7x, while keeping blocks as large as the byte budget allows.
        two_step_rows = _round_up((rows + 1) // 2, sub)
        block_rows = min(cap_rows, two_step_rows)

    grid = (pl.cdiv(rows, block_rows),)
    block_bytes = block_rows * _LANE * itemsize
    # Double-buffered in + out ~= 4x block_bytes; request headroom but stay well
    # under v7x's 64 MiB physical VMEM.
    vmem_limit = int(min(64 * 1024 * 1024, max(32 * 1024 * 1024, 6 * block_bytes)))

    out2d = pl.pallas_call(
        _swish_kernel,
        out_shape=jax.ShapeDtypeStruct((rows, _LANE), orig_dtype),
        grid_spec=pltpu.PrefetchScalarGridSpec(
            num_scalar_prefetch=0,
            grid=grid,
            in_specs=[pl.BlockSpec((block_rows, _LANE), lambda i: (i, 0))],
            out_specs=pl.BlockSpec((block_rows, _LANE), lambda i: (i, 0)),
        ),
        compiler_params=pltpu.CompilerParams(
            dimension_semantics=("parallel",),
            vmem_limit_bytes=vmem_limit,
        ),
    )(x2d)

    out = out2d.reshape(-1)
    if padded_total != total:
        out = out[:total]
    return out.reshape(orig_shape)


if __name__ == "__main__":
    key = jax.random.PRNGKey(0)
    # NCDHW activation consistent with a Conv3D pipeline: (N=2, C=4, D=8, H=16, W=16)
    x = jax.random.normal(key, (2, 4, 8, 16, 16), dtype=jnp.float32)
    y = jax.block_until_ready(swish(x))
    y_ref = x * jax.nn.sigmoid(x)
    assert y.shape == x.shape and y.dtype == x.dtype
    assert jnp.allclose(y, y_ref, atol=1e-6, rtol=1e-6)

    # Ragged (non-lane-aligned) shape exercises the padded fallback path.
    x2 = jax.random.normal(jax.random.PRNGKey(1), (3, 5, 7, 11), dtype=jnp.float32)
    y2 = jax.block_until_ready(swish(x2))
    assert jnp.allclose(y2, x2 * jax.nn.sigmoid(x2), atol=1e-6, rtol=1e-6)

    # bf16 I/O path (f32 compute inside the kernel, cast back).
    x3 = jax.random.normal(jax.random.PRNGKey(2), (2, 4, 8, 16, 16), dtype=jnp.bfloat16)
    y3 = jax.block_until_ready(swish(x3))
    ref3 = (x3.astype(jnp.float32) * jax.nn.sigmoid(x3.astype(jnp.float32))).astype(jnp.bfloat16)
    assert y3.dtype == jnp.bfloat16
    assert jnp.allclose(y3.astype(jnp.float32), ref3.astype(jnp.float32), atol=1e-2, rtol=1e-2)

    # Larger multi-block path (forces grid > 2 and the byte-budget cap logic).
    x4 = jax.random.normal(jax.random.PRNGKey(3), (4, 8, 8, 32, 32), dtype=jnp.float32)
    y4 = jax.block_until_ready(swish(x4))
    assert jnp.allclose(y4, x4 * jax.nn.sigmoid(x4), atol=1e-6, rtol=1e-6)

    print("KERNEL_OK")
</pallas_src>

<mosaic_0001>
module attributes {stable_mosaic.version = 11 : i64} {
  func.func @_swish_kernel(%arg0: i32, %arg1: memref<64x128xf32, #tpu.memory_space<vmem>>, %arg2: memref<64x128xf32, #tpu.memory_space<vmem>>) attributes {dimension_semantics = [#tpu.dimension_semantics<parallel>], iteration_bounds = array<i64: 2>, scalar_prefetch = 0 : i64, scratch_operands = 0 : i64, tpu.core_type = #tpu.core_type<tc>, window_params = [{transform_indices = @transform_0, window_bounds = array<i64: 64, 128>}, {transform_indices = @transform_1, window_bounds = array<i64: 64, 128>}]} {
    %c0 = arith.constant 0 : index
    %c0_0 = arith.constant 0 : index
    %0 = vector.load %arg1[%c0, %c0_0] : memref<64x128xf32, #tpu.memory_space<vmem>>, vector<64x128xf32>
    %1 = arith.negf %0 : vector<64x128xf32>
    %2 = math.exp %1 : vector<64x128xf32>
    %cst = arith.constant 1.000000e+00 : f32
    %3 = vector.broadcast %cst : f32 to vector<64x128xf32>
    %4 = arith.addf %3, %2 : vector<64x128xf32>
    %5 = arith.divf %3, %4 : vector<64x128xf32>
    %6 = arith.mulf %0, %5 : vector<64x128xf32>
    %c0_1 = arith.constant 0 : index
    %c0_2 = arith.constant 0 : index
    %7 = vector.load %arg2[%c0_1, %c0_2] : memref<64x128xf32, #tpu.memory_space<vmem>>, vector<64x128xf32>
    tpu.vector_store %arg2[%c0_1, %c0_2], %6 {strides = array<i32>} : memref<64x128xf32, #tpu.memory_space<vmem>>, vector<64x128xf32>,
    return
  }
  func.func @transform_0(%arg0: i32) -> (i32, i32) {
    %c0_i32 = arith.constant 0 : i32
    %c0_i32_0 = arith.constant 0 : i32
    return %arg0, %c0_i32 : i32, i32
  }
  func.func @transform_1(%arg0: i32) -> (i32, i32) {
    %c0_i32 = arith.constant 0 : i32
    %c0_i32_0 = arith.constant 0 : i32
    return %arg0, %c0_i32 : i32, i32
  }
}

</mosaic_0001>

<llo_original>
// kernel: tpu_custom_call.1
$region0: #{tpu_custom_call.1}
  #allocation0 [shape = 'u32[]', space=smem, size = 0x4, offset = 0x4, fixed_abs, tag = 'smem constant byte address 0x4 - core index']
  #allocation1 [shape = 'u32[144,128]{1,0:T(1,128)}', space=vmem, size = 0x12000, scoped, tag = 'internal scratch']
  %s0 = inlined_call_operand.hbm [shape: f32[128,128], index: 0, kind: input, shape index: {}]
  %s1 = inlined_call_operand.hbm [shape: f32[128,128], index: 1, kind: output, shape index: {}]
  %s2 = sld [smem:[#allocation0]]
  $region41: #{tpu_custom_call.1} parent=0
    _
  %s4 = ssub.s32 1, %s2
  %s5 = scalar_select 0, %s4, %s2
  $region1: #{tpu_custom_call.1} parent=0
    #allocation2 [shape = 'u8[65536]{0}', space=vmem, size = 0x10000, scoped, tag = 'input window, operand 0']
    #allocation3 [shape = 's32[2]{0}', space=sflag, size = 0x8, scoped, tag = 'scoped memory for tpu_custom_call.1']
    #allocation4 [shape = 's32[2]{0}', space=sflag, size = 0x8, scoped, tag = 'scoped memory for tpu_custom_call.1']
    #allocation5 [shape = 'u8[65536]{0}', space=vmem, size = 0x10000, scoped, tag = 'output window, operand 0']
    %6 = vsyncpa [#allocation3], 0
    %s7 = scalar_lea.sflag [#allocation3], 1
    %8 = vsyncpa %s7, 0
    %9 = vsyncpa [#allocation4], 0
    %s10 = scalar_lea.sflag [#allocation4], 1
    %11 = vsyncpa %s10, 0
    loop: start=0, step=1, limit=4
    $region2: #{tpu_custom_call.1} parent=1 // loop_pre_header
      _
    $region3: #{tpu_custom_call.1} parent=1 // loop_header
      %s13 = sphi 0, %s17
      %p14 = scmp.ge.s32.totalorder %s13, 4
      %s23 = sphi 0, %s25
      %s26 = sphi 0, %s23
      %s27 = sphi 0, %s26
      %s43 = sphi 0, %s27
      %s49 = sphi 0, %s51
      %s52 = sphi 0, %s49
      %s53 = sphi 0, %s52
      %s69 = sphi 0, %s53
    $region4: #{tpu_custom_call.1} parent=1 // loop_header_branch
      %16 = sbr.rel (%p14) target = $region8
    $region5: #{tpu_custom_call.1} parent=1 // loop_body
      %s18 = ssub.s32 %s13, 1
      %s19 = ssub.s32 %s13, 2
      %s20 = sadd.s32 %s13, 1
      %s21 = ssub.s32 %s13, %s20
      %p22 = scmp.eq.s32.totalorder %s21, 0
      %s24 = sadd.s32 %s23, 1
      %s25 = scalar_select %p22, %s23, %s24
      %p28 = pneg %p22
      %p29 = scmp.eq.s32.totalorder %s13, 1
      %p30 = por %p28, %p29
      %p31 = scmp.ne.s32.totalorder %s23, %s26
      %p32 = scmp.eq.s32.totalorder %s13, 0
      %p33 = por %p31, %p32
      %p34 = scmp.ne.s32.totalorder %s23, %s26
      %p35 = scmp.eq.s32.totalorder %s18, 1
      %p36 = por %p34, %p35
      %p37 = scmp.ne.s32.totalorder %s26, %s27
      %p38 = scmp.eq.s32.totalorder %s18, 0
      %p39 = por %p37, %p38
      %p40 = scmp.ne.s32.totalorder %s26, %s27
      %p41 = scmp.eq.s32.totalorder %s19, 1
      %p42 = por %p40, %p41
      %p44 = scmp.ne.s32.totalorder %s27, %s43
      %p45 = scmp.eq.s32.totalorder %s19, 0
      %p46 = por %p44, %p45
      %s47 = ssub.s32 %s13, %s20
      %p48 = scmp.eq.s32.totalorder %s47, 0
      %s50 = sadd.s32 %s49, 1
      %s51 = scalar_select %p48, %s49, %s50
      %p54 = pneg %p48
      %p55 = scmp.eq.s32.totalorder %s13, 1
      %p56 = por %p54, %p55
      %p57 = scmp.ne.s32.totalorder %s49, %s52
      %p58 = scmp.eq.s32.totalorder %s13, 0
      %p59 = por %p57, %p58
      %p60 = scmp.ne.s32.totalorder %s49, %s52
      %p61 = scmp.eq.s32.totalorder %s18, 1
      %p62 = por %p60, %p61
      %p63 = scmp.ne.s32.totalorder %s52, %s53
      %p64 = scmp.eq.s32.totalorder %s18, 0
      %p65 = por %p63, %p64
      %p66 = scmp.ne.s32.totalorder %s52, %s53
      %p67 = scmp.eq.s32.totalorder %s19, 1
      %p68 = por %p66, %p67
      %p70 = scmp.ne.s32.totalorder %s53, %s69
      %p71 = scmp.eq.s32.totalorder %s19, 0
      %p72 = por %p70, %p71
      %p73 = scmp.le.s32.totalorder 1, %s13
      %p74 = scmp.lt.s32.totalorder %s13, 3
      %p75 = pnand %p73, %p74
      %p76 = pneg %p75
      // Predicated region
      $region9: #{tpu_custom_call.1} parent=5 // pred_check
        _
      $region10: #{tpu_custom_call.1} parent=5 // pred_check_branch
        %78 = sbr.rel (%p75) target = $region12
      $region11: #{tpu_custom_call.1} parent=5 // pred_region
        %s79 = ssub.s32 %s13, 1
      $region12: #{tpu_custom_call.1} parent=5 // pred_fallthru
        _
      %p80 = scmp.lt.s32.totalorder %s13, 2
      // Predicated region
      $region13: #{tpu_custom_call.1} parent=5 // pred_check
        %p81 = pneg %p80
      $region14: #{tpu_custom_call.1} parent=5 // pred_check_branch
        %83 = sbr.rel (%p81) target = $region16
      $region15: #{tpu_custom_call.1} parent=5 // pred_region
        // Predicated region
        $region17: #{tpu_custom_call.1} parent=15 // pred_check
          %p84 = pneg %p33
        $region18: #{tpu_custom_call.1} parent=15 // pred_check_branch
          %86 = sbr.rel (%p84) target = $region20
        $region19: #{tpu_custom_call.1} parent=15 // pred_region
          %s87 = sand.u32 %s23, 1
          %s88 = scalar_lea.sflag [#allocation3], %s87
          %s89 = sand.u32 %s23, 1
          %s90 = smul.addr %s89, 64
          %s91 = scalar_lea.vmem [#allocation2], %s90
          %s92 = smul.u32 8, %s13
          %s94 = ssub.s32 1024, 1024
          %95 = vsyncadd %s88, %s94
          %s96 = smul.addr %s92, 128
          %s97 = scalar_lea.hbm %s0, %s96
          %s98 = sshll.u32 %s91, 4
          %s99 = int_to_ptr.vmem [resolvable:$true] %s98
          %104 = dma.hbm_to_vmem [thread:$0]  %s97, 1024, %s99, %s88, 128, 128, 8
        $region20: #{tpu_custom_call.1} parent=15 // pred_fallthru
          _
      $region16: #{tpu_custom_call.1} parent=5 // pred_fallthru
        _
      %p105 = scmp.le.s32.totalorder 1, %s13
      %p106 = scmp.lt.s32.totalorder %s13, 3
      %p107 = pnand %p105, %p106
      %p108 = pneg %p107
      // Predicated region
      $region21: #{tpu_custom_call.1} parent=5 // pred_check
        _
      $region22: #{tpu_custom_call.1} parent=5 // pred_check_branch
        %110 = sbr.rel (%p107) target = $region24
      $region23: #{tpu_custom_call.1} parent=5 // pred_region
        %s111 = ssub.s32 %s13, 1
        %s112 = sand.u32 %s26, 1
        %s113 = scalar_lea.sflag [#allocation3], %s112
        %s114 = sand.u32 %s26, 1
        %s115 = smul.addr %s114, 64
        %s116 = scalar_lea.vmem [#allocation2], %s115
        // Predicated region
        $region25: #{tpu_custom_call.1} parent=23 // pred_check
          %p117 = pneg %p39
        $region26: #{tpu_custom_call.1} parent=23 // pred_check_branch
          %119 = sbr.rel (%p117) target = $region28
        $region27: #{tpu_custom_call.1} parent=23 // pred_region
          %120 = dma.done %s113, 1024
        $region28: #{tpu_custom_call.1} parent=23 // pred_fallthru
          _
        %s121 = sand.u32 %s26, 1
        %s122 = scalar_lea.sflag [#allocation3], %s121
        %s123 = sand.u32 %s26, 1
        %s124 = smul.addr %s123, 64
        %s125 = scalar_lea.vmem [#allocation2], %s124
        %p126 = pneg %p39
        %p127 = pneg %p36
        %p128 = pneg %p65
        %p129 = pneg %p62
        %s130 = sand.u32 %s52, 1
        %s131 = scalar_lea.sflag [#allocation4], %s130
        %s132 = sand.u32 %s52, 1
        %s133 = smul.addr %s132, 64
        %s134 = scalar_lea.vmem [#allocation5], %s133
        %s135 = smul.u32 8, %s18
        %s136 = smul.u32 8, %s18
        %v137 = vld [vmem:[%s116] sm:$0xff]
        %v138 = vld [vmem:[%s116 + $0x8] sm:$0xff]
        %v139 = vld [vmem:[%s116 + $0x10] sm:$0xff]
        %v140 = vld [vmem:[%s116 + $0x18] sm:$0xff]
        %v141 = vld [vmem:[%s116 + $0x20] sm:$0xff]
        %v142 = vld [vmem:[%s116 + $0x28] sm:$0xff]
        %v143 = vld [vmem:[%s116 + $0x30] sm:$0xff]
        %v144 = vld [vmem:[%s116 + $0x38] sm:$0xff]
        %v145 = vxor.u32 %v137, 2147483648
        %v146 = vxor.u32 %v138, 2147483648
        %v147 = vxor.u32 %v139, 2147483648
        %v148 = vxor.u32 %v140, 2147483648
        %v149 = vxor.u32 %v141, 2147483648
        %v150 = vxor.u32 %v142, 2147483648
        %v151 = vxor.u32 %v143, 2147483648
        %v152 = vxor.u32 %v144, 2147483648
        %v153 = vmul.f32 %v145, 1.442695
        %v154 = vpow.pop %v153
        %v155 = vmul.f32 %v146, 1.442695
        %v156 = vpow.pop %v155
        %v157 = vmul.f32 %v147, 1.442695
        %v158 = vpow.pop %v157
        %v159 = vmul.f32 %v148, 1.442695
        %v160 = vpow.pop %v159
        %v161 = vmul.f32 %v149, 1.442695
        %v162 = vpow.pop %v161
        %v163 = vmul.f32 %v150, 1.442695
        %v164 = vpow.pop %v163
        %v165 = vmul.f32 %v151, 1.442695
        %v166 = vpow.pop %v165
        %v167 = vmul.f32 %v152, 1.442695
        %v168 = vpow.pop %v167
        %v169 = vadd.f32 %v154, 1.0
        %v170 = vadd.f32 %v156, 1.0
        %v171 = vadd.f32 %v158, 1.0
        %v172 = vadd.f32 %v160, 1.0
        %v173 = vadd.f32 %v162, 1.0
        %v174 = vadd.f32 %v164, 1.0
        %v175 = vadd.f32 %v166, 1.0
        %v176 = vadd.f32 %v168, 1.0
        %v177 = vrcp.pop %v169
        %v178 = vmul.f32 1.0, %v177
        %v179 = vrcp.pop %v170
        %v180 = vmul.f32 1.0, %v179
        %v181 = vrcp.pop %v171
        %v182 = vmul.f32 1.0, %v181
        %v183 = vrcp.pop %v172
        %v184 = vmul.f32 1.0, %v183
        %v185 = vrcp.pop %v173
        %v186 = vmul.f32 1.0, %v185
        %v187 = vrcp.pop %v174
        %v188 = vmul.f32 1.0, %v187
        %v189 = vrcp.pop %v175
        %v190 = vmul.f32 1.0, %v189
        %v191 = vrcp.pop %v176
        %v192 = vmul.f32 1.0, %v191
        %v193 = vmul.f32 %v137, %v178
        %v194 = vmul.f32 %v138, %v180
        %v195 = vmul.f32 %v139, %v182
        %v196 = vmul.f32 %v140, %v184
        %v197 = vmul.f32 %v141, %v186
        %v198 = vmul.f32 %v142, %v188
        %v199 = vmul.f32 %v143, %v190
        %v200 = vmul.f32 %v144, %v192
        %201 = vst [vmem:[%s134] sm:$0xff] %v193
        %202 = vst [vmem:[%s134 + $0x8] sm:$0xff] %v194
        %203 = vst [vmem:[%s134 + $0x10] sm:$0xff] %v195
        %204 = vst [vmem:[%s134 + $0x18] sm:$0xff] %v196
        %205 = vst [vmem:[%s134 + $0x20] sm:$0xff] %v197
        %206 = vst [vmem:[%s134 + $0x28] sm:$0xff] %v198
        %207 = vst [vmem:[%s134 + $0x30] sm:$0xff] %v199
        %208 = vst [vmem:[%s134 + $0x38] sm:$0xff] %v200
        %s209 = sand.u32 %s52, 1
        %s210 = scalar_lea.sflag [#allocation4], %s209
        %s211 = sand.u32 %s52, 1
        %s212 = smul.addr %s211, 64
        %s213 = scalar_lea.vmem [#allocation5], %s212
        // Predicated region
        $region29: #{tpu_custom_call.1} parent=23 // pred_check
          %p214 = pneg %p62
        $region30: #{tpu_custom_call.1} parent=23 // pred_check_branch
          %216 = sbr.rel (%p214) target = $region32
        $region31: #{tpu_custom_call.1} parent=23 // pred_region
          %s217 = smul.u32 8, %s18
          %s219 = ssub.s32 1024, 1024
          %220 = vsyncadd %s210, %s219
          %s221 = smul.addr %s217, 128
          %s222 = scalar_lea.hbm %s1, %s221
          %s223 = sshll.u32 %s213, 4
          %s224 = int_to_ptr.vmem [resolvable:$true] %s223
          %229 = dma.vmem_to_hbm [thread:$0]  %s224, 1024, %s222, %s210, 128, 128, 8
        $region32: #{tpu_custom_call.1} parent=23 // pred_fallthru
          _
      $region24: #{tpu_custom_call.1} parent=5 // pred_fallthru
        _
      %p230 = scmp.le.s32.totalorder 2, %s13
      // Predicated region
      $region33: #{tpu_custom_call.1} parent=5 // pred_check
        %p231 = pneg %p230
      $region34: #{tpu_custom_call.1} parent=5 // pred_check_branch
        %233 = sbr.rel (%p231) target = $region36
      $region35: #{tpu_custom_call.1} parent=5 // pred_region
        %s234 = ssub.s32 %s13, 2
        // Predicated region
        $region37: #{tpu_custom_call.1} parent=35 // pred_check
          %p235 = pneg %p68
        $region38: #{tpu_custom_call.1} parent=35 // pred_check_branch
          %237 = sbr.rel (%p235) target = $region40
        $region39: #{tpu_custom_call.1} parent=35 // pred_region
          %s238 = sand.u32 %s53, 1
          %s239 = scalar_lea.sflag [#allocation4], %s238
          %s240 = sand.u32 %s53, 1
          %s241 = smul.addr %s240, 64
          %s242 = scalar_lea.vmem [#allocation5], %s241
          %243 = dma.done %s239, 1024
        $region40: #{tpu_custom_call.1} parent=35 // pred_fallthru
          _
      $region36: #{tpu_custom_call.1} parent=5 // pred_fallthru
        _
    $region6: #{tpu_custom_call.1} parent=1 // loop_footer
      %s17 = sadd.s32 1, %s13
    $region7: #{tpu_custom_call.1} parent=1 // loop_footer_branch
      %12 = sbr.rel target = $region3
    $region8: #{tpu_custom_call.1} parent=1 // loop_exit
      _
    %244 = vsyncpa [#allocation3], 1
    %s245 = scalar_lea.sflag [#allocation3], 1
    %246 = vsyncpa %s245, 1
    %247 = vsyncpa [#allocation4], 1
    %s248 = scalar_lea.sflag [#allocation4], 1
    %249 = vsyncpa %s248, 1

</llo_original>
